<compile_context>
chip_gen: v7x
topology: tpu7x:2x2x1
jax: 0.10.0
libtpu: 0.0.40
codegen_flags: <defaults>
</compile_context>

<pallas_src>
import functools

import jax
import jax.numpy as jnp
from jax.experimental import pallas as pl
from jax.experimental.pallas import tpu as pltpu


def _round_up(x, m):
    return (x + m - 1) // m * m


# --------------------------- task cross-entropy ----------------------------- #

def _ce_kernel(logits_ref, labels_ref, out_ref, *, ignore_index):
    """Softmax CE, mean over non-ignored rows. out_ref is a (1,) f32 SMEM ref."""
    logits = logits_ref[...].astype(jnp.float32)          # (B, C)
    labels = labels_ref[...]                               # (B, 1) int32
    B, C = logits.shape
    m = jnp.max(logits, axis=1, keepdims=True)
    lse = jnp.log(jnp.sum(jnp.exp(logits - m), axis=1, keepdims=True)) + m
    class_iota = jax.lax.broadcasted_iota(jnp.int32, (B, C), 1)
    target = jnp.sum(jnp.where(class_iota == labels, logits, 0.0),
                     axis=1, keepdims=True)                # (B, 1)
    valid = (labels != ignore_index).astype(jnp.float32)   # (B, 1)
    n_valid = jnp.sum(valid)
    total = jnp.sum((lse - target) * valid)
    out_ref[0] = jnp.where(n_valid > 0.0, total / jnp.maximum(n_valid, 1.0),
                           jnp.float32(0.0))


def cross_entropy_loss(logits, labels, *, ignore_index=-100):
    """Equivalent of nn.CrossEntropyLoss()(logits, labels) (mean reduction)."""
    B, C = logits.shape
    labels2d = labels.astype(jnp.int32).reshape(B, 1)
    # TODO(synk): for vocab-sized C, block over C with an online logsumexp.
    cost = pl.CostEstimate(
        flops=8 * B * C,
        transcendentals=B * C + B,
        bytes_accessed=B * C * logits.dtype.itemsize + B * 4 + 4,
    )
    out = pl.pallas_call(
        functools.partial(_ce_kernel, ignore_index=int(ignore_index)),
        out_shape=jax.ShapeDtypeStruct((1,), jnp.float32),
        in_specs=[pl.BlockSpec(memory_space=pltpu.MemorySpace.VMEM),
                  pl.BlockSpec(memory_space=pltpu.MemorySpace.VMEM)],
        out_specs=pl.BlockSpec(memory_space=pltpu.MemorySpace.SMEM),
        cost_estimate=cost,
    )(logits, labels2d)
    return out[0]


# ------------------- blocked supervised contrastive loss -------------------- #

def _supcon_blocked_kernel(reps_ref, reps_t_ref, inv_col_ref, inv_row_ref,
                           lab_col_ref, lab_row_ref,
                           loss_ref, cnt_ref,
                           row_n_ref, sum_exp_ref, pos_sum_ref, npos_ref,
                           *, inv_temperature, batch, padded_batch, mxu_dtype):
    """One (tm x tn) tile of the gram matrix; accumulates per-row statistics."""
    i = pl.program_id(0)
    j = pl.program_id(1)
    tm = row_n_ref.shape[0]
    tn = reps_t_ref.shape[1]

    @pl.when(j == 0)
    def _init():
        # Normalize the resident row tile once per row block (F.normalize):
        # x / max(||x||, 1e-12) == x * rsqrt(max(||x||^2, 1e-24)); inv-norms are
        # precomputed in the wrapper so no in-kernel cross-lane reduce is needed.
        row_n_ref[...] = (reps_ref[...].astype(jnp.float32)
                          * inv_col_ref[...]).astype(mxu_dtype)
        sum_exp_ref[...] = jnp.zeros_like(sum_exp_ref)
        pos_sum_ref[...] = jnp.zeros_like(pos_sum_ref)
        npos_ref[...] = jnp.zeros_like(npos_ref)

    # Column tile arrives pre-transposed (D, tn) -> contract ((1,),(0,)):
    # no implicit XLU transpose on the MXU path.
    col_n = (reps_t_ref[...].astype(jnp.float32)
             * inv_row_ref[...]).astype(mxu_dtype)                    # (D, tn)
    sim = jax.lax.dot_general(
        row_n_ref[...], col_n,
        dimension_numbers=(((1,), (0,)), ((), ())),
        preferred_element_type=jnp.float32,
    ) * inv_temperature                                               # (tm, tn)

    # Shift by the constant bound 1/T (|cos| <= 1): exponents stay <= ~0 and the
    # final pos_sum / sum_exp ratio is invariant to a per-row shift.
    exp_sim = jnp.exp(sim - inv_temperature)

    row_g = i * tm + jax.lax.broadcasted_iota(jnp.int32, (tm, tn), 0)
    col_g = j * tn + jax.lax.broadcasted_iota(jnp.int32, (tm, tn), 1)
    eq = lab_col_ref[...] == lab_row_ref[...]                         # (tm, tn) bool
    pos_mask = jnp.logical_and(eq, row_g != col_g)                    # diag masked explicitly
    if padded_batch != batch:
        col_valid = col_g < batch
        exp_den = jnp.where(col_valid, exp_sim, 0.0)
        pos_mask = jnp.logical_and(pos_mask, col_valid)
    else:
        exp_den = exp_sim

    # Denominator keeps the self-similarity term, matching the PyTorch reference.
    sum_exp_ref[...] += jnp.sum(exp_den, axis=1, keepdims=True)
    pos_sum_ref[...] += jnp.sum(jnp.where(pos_mask, exp_sim, 0.0),
                                axis=1, keepdims=True)
    npos_ref[...] += jnp.sum(pos_mask.astype(jnp.float32), axis=1, keepdims=True)

    @pl.when(j == pl.num_programs(1) - 1)
    def _finalize():
        has_pos = npos_ref[...] > 0.0
        # -log(pos/den) == log(den) - log(pos); tiny floor guards a fully
        # underflowed pos_sum (cannot occur for |cos| <= 1, pure paranoia).
        loss_i = (jnp.log(sum_exp_ref[...])
                  - jnp.log(jnp.maximum(
                      jnp.where(has_pos, pos_sum_ref[...], 1.0), 1e-30)))
        loss_ref[...] = jnp.where(has_pos, loss_i, 0.0)
        cnt_ref[...] = has_pos.astype(jnp.float32)


def supervised_contrastive_loss(representations, labels, temperature, *,
                                use_bf16_matmul=None, block=256):
    """Supervised contrastive loss matching the PyTorch reference (flash-style)."""
    B, D = representations.shape
    in_dtype = representations.dtype
    if use_bf16_matmul is None:
        use_bf16_matmul = in_dtype == jnp.bfloat16
    mxu_dtype = jnp.bfloat16 if use_bf16_matmul else jnp.float32

    # Tile plan: full batch (rounded to 8) for small B; 256x256 MXU-shaped tiles
    # otherwise.  TODO(synk): 128-wide tiles on v5e; re-derive budget for v7x.
    tile = block if B > block else _round_up(max(B, 8), 8)
    Bp = _round_up(B, tile)
    n_i, n_j = Bp // tile, Bp // tile

    reps = representations
    lab = labels.astype(jnp.int32).reshape(B, 1)
    if Bp != B:
        reps = jnp.pad(reps, ((0, Bp - B), (0, 0)))
        lab = jnp.pad(lab, ((0, Bp - B), (0, 0)), constant_values=-1)

    # Precompute per-row inverse norms (cheap XLA reduce) so both the (tm,D) row
    # tile and the pre-transposed (D,tn) column tile normalize with a lane/sublane
    # aligned broadcast -- no in-kernel transpose or sublane reduction.
    sumsq = jnp.sum(jnp.square(reps.astype(jnp.float32)), axis=1, keepdims=True)
    inv_norm = jax.lax.rsqrt(jnp.maximum(sumsq, 1e-24))               # (Bp, 1) f32
    reps_t = reps.T                                                    # (D, Bp)

    kernel = functools.partial(
        _supcon_blocked_kernel,
        inv_temperature=1.0 / float(temperature),
        batch=B, padded_batch=Bp, mxu_dtype=mxu_dtype,
    )
    cost = pl.CostEstimate(
        flops=2 * Bp * Bp * D + 12 * Bp * Bp + 4 * Bp * D,
        transcendentals=Bp * Bp + 3 * Bp,
        bytes_accessed=(2 * Bp * D) * in_dtype.itemsize + 6 * Bp * 4,
    )

    grid_spec = pltpu.PrefetchScalarGridSpec(
        num_scalar_prefetch=0,
        grid=(n_i, n_j),
        in_specs=[
            pl.BlockSpec((tile, D), lambda i, j: (i, 0)),   # reps row tile
            pl.BlockSpec((D, tile), lambda i, j: (0, j)),   # reps^T column tile
            pl.BlockSpec((tile, 1), lambda i, j: (i, 0)),   # inv_norm (col form)
            pl.BlockSpec((1, tile), lambda i, j: (0, j)),   # inv_norm (row form)
            pl.BlockSpec((tile, 1), lambda i, j: (i, 0)),   # labels (col form)
            pl.BlockSpec((1, tile), lambda i, j: (0, j)),   # labels (row form)
        ],
        out_specs=[
            pl.BlockSpec((tile, 1), lambda i, j: (i, 0)),   # per-row loss
            pl.BlockSpec((tile, 1), lambda i, j: (i, 0)),   # per-row has_pos
        ],
        scratch_shapes=[
            pltpu.VMEM((tile, D), mxu_dtype),               # normalized row tile
            pltpu.VMEM((tile, 1), jnp.float32),             # sum_exp
            pltpu.VMEM((tile, 1), jnp.float32),             # pos_sum
            pltpu.VMEM((tile, 1), jnp.float32),             # n_pos
        ],
    )

    loss_rows, cnt_rows = pl.pallas_call(
        kernel,
        out_shape=(jax.ShapeDtypeStruct((Bp, 1), jnp.float32),
                   jax.ShapeDtypeStruct((Bp, 1), jnp.float32)),
        grid_spec=grid_spec,
        compiler_params=pltpu.CompilerParams(
            dimension_semantics=("parallel", "arbitrary")),
        cost_estimate=cost,
    )(reps, reps_t, inv_norm, inv_norm.reshape(1, Bp), lab, lab.reshape(1, Bp))

    loss_rows = loss_rows[:B, 0]
    cnt_rows = cnt_rows[:B, 0]
    count = jnp.sum(cnt_rows)
    total = jnp.sum(loss_rows)
    return jnp.where(count > 0.0, total / jnp.maximum(count, 1.0),
                     jnp.float32(0.0))


# --------------------------------- module ----------------------------------- #

class MultiTaskGenerativeLossPallas:
    """JAX/Pallas port of the PyTorch MultiTaskGenerativeLoss forward pass.

    Returns (total_loss, loss_dict) with loss_dict holding jnp scalars (no
    host syncs), so the whole path can be jitted end-to-end.
    """

    def __init__(self, config=None):
        cfg = config or {}
        self.generation_weight = cfg.get("generation_loss_weight", 1.0)
        self.task_weight = cfg.get("task_classification_weight", 0.5)
        self.contrastive_weight = cfg.get("contrastive_loss_weight", 0.3)
        self.temperature = cfg.get("contrastive_temperature", 0.07)
        # None -> follow input dtype; True forces bf16 gram operands on the MXU.
        self.contrastive_bf16_matmul = cfg.get("contrastive_bf16_matmul", None)

    def __call__(self, outputs, task_labels=None, contrastive_labels=None):
        total_loss = jnp.float32(0.0)
        loss_dict = {}

        if "loss" in outputs:
            generation_loss = jnp.asarray(outputs["loss"], jnp.float32)
            total_loss = total_loss + self.generation_weight * generation_loss
            loss_dict["generation_loss"] = generation_loss

        if "task_logits" in outputs and task_labels is not None:
            task_loss = cross_entropy_loss(outputs["task_logits"], task_labels)
            total_loss = total_loss + self.task_weight * task_loss
            loss_dict["task_loss"] = task_loss

        if "contrastive_repr" in outputs and contrastive_labels is not None:
            contrastive_loss = supervised_contrastive_loss(
                outputs["contrastive_repr"], contrastive_labels, self.temperature,
                use_bf16_matmul=self.contrastive_bf16_matmul)
            total_loss = total_loss + self.contrastive_weight * contrastive_loss
            loss_dict["contrastive_loss"] = contrastive_loss

        loss_dict["total_loss"] = total_loss
        return total_loss, loss_dict


# ---------------------------------- main ------------------------------------ #

if __name__ == "__main__":
    key = jax.random.PRNGKey(0)
    k_gen, k_logits, k_tlab, k_repr, k_clab = jax.random.split(key, 5)

    batch = 8
    num_tasks = 4
    hidden = 32

    generation_loss = jnp.abs(jax.random.normal(k_gen, (), jnp.float32)) + 1.0
    task_logits = jax.random.normal(k_logits, (batch, num_tasks), jnp.float32)
    task_labels = jax.random.randint(k_tlab, (batch,), 0, num_tasks, jnp.int32)
    contrastive_repr = jax.random.normal(k_repr, (batch, hidden), jnp.float32)
    contrastive_labels = jax.random.randint(k_clab, (batch,), 0, 3, jnp.int32)

    outputs = {
        "loss": generation_loss,
        "task_logits": task_logits,
        "contrastive_repr": contrastive_repr,
    }

    loss_fn = MultiTaskGenerativeLossPallas(
        {
            "generation_loss_weight": 1.0,
            "task_classification_weight": 0.5,
            "contrastive_loss_weight": 0.3,
            "contrastive_temperature": 0.07,
        }
    )

    # Jit the whole loss path end-to-end; loss_dict is a pytree of jnp scalars.
    run = jax.jit(lambda o, tl, cl: loss_fn(o, tl, cl))
    total_loss, loss_dict = run(outputs, task_labels, contrastive_labels)
    total_loss = jax.block_until_ready(total_loss)
    jax.block_until_ready(loss_dict["total_loss"])
    print("KERNEL_OK")
</pallas_src>

<mosaic_0001>
module attributes {stable_mosaic.version = 11 : i64} {
  func.func @_supcon_blocked_kernel(%arg0: i32, %arg1: i32, %arg2: memref<8x32xf32, #tpu.memory_space<vmem>>, %arg3: memref<32x8xf32, #tpu.memory_space<vmem>>, %arg4: memref<8x1xf32, #tpu.memory_space<vmem>>, %arg5: memref<1x8xf32, #tpu.memory_space<vmem>>, %arg6: memref<8x1xi32, #tpu.memory_space<vmem>>, %arg7: memref<1x8xi32, #tpu.memory_space<vmem>>, %arg8: memref<8x1xf32, #tpu.memory_space<vmem>>, %arg9: memref<8x1xf32, #tpu.memory_space<vmem>>, %arg10: memref<8x32xf32, #tpu.memory_space<vmem>>, %arg11: memref<8x1xf32, #tpu.memory_space<vmem>>, %arg12: memref<8x1xf32, #tpu.memory_space<vmem>>, %arg13: memref<8x1xf32, #tpu.memory_space<vmem>>) attributes {dimension_semantics = [#tpu.dimension_semantics<parallel>, #tpu.dimension_semantics<arbitrary>], iteration_bounds = array<i64: 1, 1>, scalar_prefetch = 0 : i64, scratch_operands = 4 : i64, tpu.core_type = #tpu.core_type<tc>, window_params = [{transform_indices = @transform_0, window_bounds = array<i64: 8, 32>}, {transform_indices = @transform_1, window_bounds = array<i64: 32, 8>}, {transform_indices = @transform_2, window_bounds = array<i64: 8, 1>}, {transform_indices = @transform_3, window_bounds = array<i64: 1, 8>}, {transform_indices = @transform_4, window_bounds = array<i64: 8, 1>}, {transform_indices = @transform_5, window_bounds = array<i64: 1, 8>}, {transform_indices = @transform_6, window_bounds = array<i64: 8, 1>}, {transform_indices = @transform_7, window_bounds = array<i64: 8, 1>}]} {
    %c0_i32 = arith.constant 0 : i32
    %0 = arith.cmpi eq, %arg1, %c0_i32 : i32
    %1 = arith.extui %0 : i1 to i32
    %c0_i32_0 = arith.constant 0 : i32
    %2 = arith.cmpi ne, %1, %c0_i32_0 : i32
    scf.if %2 {
      %c0_31 = arith.constant 0 : index
      %c0_32 = arith.constant 0 : index
      %51 = vector.load %arg2[%c0_31, %c0_32] : memref<8x32xf32, #tpu.memory_space<vmem>>, vector<8x32xf32>
      %c0_33 = arith.constant 0 : index
      %c0_34 = arith.constant 0 : index
      %52 = vector.load %arg4[%c0_33, %c0_34] : memref<8x1xf32, #tpu.memory_space<vmem>>, vector<8x1xf32>
      %53 = vector.broadcast %52 : vector<8x1xf32> to vector<8x32xf32>
      %54 = arith.mulf %51, %53 : vector<8x32xf32>
      %c0_35 = arith.constant 0 : index
      %c0_36 = arith.constant 0 : index
      %55 = vector.load %arg10[%c0_35, %c0_36] : memref<8x32xf32, #tpu.memory_space<vmem>>, vector<8x32xf32>
      tpu.vector_store %arg10[%c0_35, %c0_36], %54 {strides = array<i32>} : memref<8x32xf32, #tpu.memory_space<vmem>>, vector<8x32xf32>,
      %cst_37 = arith.constant 0.000000e+00 : f32
      %56 = vector.broadcast %cst_37 : f32 to vector<8x1xf32>
      %c0_38 = arith.constant 0 : index
      %c0_39 = arith.constant 0 : index
      %57 = vector.load %arg11[%c0_38, %c0_39] : memref<8x1xf32, #tpu.memory_space<vmem>>, vector<8x1xf32>
      tpu.vector_store %arg11[%c0_38, %c0_39], %56 {strides = array<i32>} : memref<8x1xf32, #tpu.memory_space<vmem>>, vector<8x1xf32>,
      %cst_40 = arith.constant 0.000000e+00 : f32
      %58 = vector.broadcast %cst_40 : f32 to vector<8x1xf32>
      %c0_41 = arith.constant 0 : index
      %c0_42 = arith.constant 0 : index
      %59 = vector.load %arg12[%c0_41, %c0_42] : memref<8x1xf32, #tpu.memory_space<vmem>>, vector<8x1xf32>
      tpu.vector_store %arg12[%c0_41, %c0_42], %58 {strides = array<i32>} : memref<8x1xf32, #tpu.memory_space<vmem>>, vector<8x1xf32>,
      %cst_43 = arith.constant 0.000000e+00 : f32
      %60 = vector.broadcast %cst_43 : f32 to vector<8x1xf32>
      %c0_44 = arith.constant 0 : index
      %c0_45 = arith.constant 0 : index
      %61 = vector.load %arg13[%c0_44, %c0_45] : memref<8x1xf32, #tpu.memory_space<vmem>>, vector<8x1xf32>
      tpu.vector_store %arg13[%c0_44, %c0_45], %60 {strides = array<i32>} : memref<8x1xf32, #tpu.memory_space<vmem>>, vector<8x1xf32>,
    } else {
    }
    %c0 = arith.constant 0 : index
    %c0_1 = arith.constant 0 : index
    %3 = vector.load %arg3[%c0, %c0_1] : memref<32x8xf32, #tpu.memory_space<vmem>>, vector<32x8xf32>
    %c0_2 = arith.constant 0 : index
    %c0_3 = arith.constant 0 : index
    %4 = vector.load %arg5[%c0_2, %c0_3] : memref<1x8xf32, #tpu.memory_space<vmem>>, vector<1x8xf32>
    %5 = vector.broadcast %4 : vector<1x8xf32> to vector<32x8xf32>
    %6 = arith.mulf %3, %5 : vector<32x8xf32>
    %c0_4 = arith.constant 0 : index
    %c0_5 = arith.constant 0 : index
    %7 = vector.load %arg10[%c0_4, %c0_5] : memref<8x32xf32, #tpu.memory_space<vmem>>, vector<8x32xf32>
    %cst = arith.constant dense<0.000000e+00> : vector<8x8xf32>
    %8 = tpu.matmul %7, %6, %cst {dimension_numbers = #tpu.dot_dimension_numbers<[1], [0], [0], [1], [0, 0, 1, 1], [], []>} : vector<8x32xf32>, vector<32x8xf32>, vector<8x8xf32> -> vector<8x8xf32>
    %cst_6 = arith.constant 14.2857141 : f32
    %9 = vector.broadcast %cst_6 : f32 to vector<8x8xf32>
    %10 = arith.mulf %8, %9 : vector<8x8xf32>
    %cst_7 = arith.constant 14.2857141 : f32
    %11 = vector.broadcast %cst_7 : f32 to vector<8x8xf32>
    %12 = arith.subf %10, %11 : vector<8x8xf32>
    %13 = math.exp %12 : vector<8x8xf32>
    %c8_i32 = arith.constant 8 : i32
    %14 = arith.muli %arg0, %c8_i32 : i32
    %15 = tpu.iota {dimensions = array<i32: 0>} : vector<8x8xi32>
    %16 = vector.broadcast %14 : i32 to vector<8x8xi32>
    %17 = arith.addi %16, %15 : vector<8x8xi32>
    %c8_i32_8 = arith.constant 8 : i32
    %18 = arith.muli %arg1, %c8_i32_8 : i32
    %19 = tpu.iota {dimensions = array<i32: 1>} : vector<8x8xi32>
    %20 = vector.broadcast %18 : i32 to vector<8x8xi32>
    %21 = arith.addi %20, %19 : vector<8x8xi32>
    %c0_9 = arith.constant 0 : index
    %c0_10 = arith.constant 0 : index
    %22 = vector.load %arg6[%c0_9, %c0_10] : memref<8x1xi32, #tpu.memory_space<vmem>>, vector<8x1xi32>
    %c0_11 = arith.constant 0 : index
    %c0_12 = arith.constant 0 : index
    %23 = vector.load %arg7[%c0_11, %c0_12] : memref<1x8xi32, #tpu.memory_space<vmem>>, vector<1x8xi32>
    %24 = vector.broadcast %22 : vector<8x1xi32> to vector<8x8xi32>
    %25 = vector.broadcast %23 : vector<1x8xi32> to vector<8x8xi32>
    %26 = arith.cmpi eq, %24, %25 : vector<8x8xi32>
    %27 = arith.cmpi ne, %17, %21 : vector<8x8xi32>
    %28 = arith.andi %26, %27 : vector<8x8xi1>
    %c0_13 = arith.constant 0 : index
    %c0_14 = arith.constant 0 : index
    %29 = vector.load %arg11[%c0_13, %c0_14] : memref<8x1xf32, #tpu.memory_space<vmem>>, vector<8x1xf32>
    %cst_15 = arith.constant dense<0.000000e+00> : vector<8xf32>
    %30 = vector.multi_reduction <add>, %13, %cst_15 [1] : vector<8x8xf32> to vector<8xf32>
    %31 = vector.shape_cast %30 : vector<8xf32> to vector<8x1xf32>
    %32 = arith.addf %29, %31 : vector<8x1xf32>
    %c0_16 = arith.constant 0 : index
    %c0_17 = arith.constant 0 : index
    %33 = vector.load %arg11[%c0_16, %c0_17] : memref<8x1xf32, #tpu.memory_space<vmem>>, vector<8x1xf32>
    tpu.vector_store %arg11[%c0_16, %c0_17], %32 {strides = array<i32>} : memref<8x1xf32, #tpu.memory_space<vmem>>, vector<8x1xf32>,
    %c0_18 = arith.constant 0 : index
    %c0_19 = arith.constant 0 : index
    %34 = vector.load %arg12[%c0_18, %c0_19] : memref<8x1xf32, #tpu.memory_space<vmem>>, vector<8x1xf32>
    %cst_20 = arith.constant 0.000000e+00 : f32
    %35 = vector.broadcast %cst_20 : f32 to vector<8x8xf32>
    %36 = arith.select %28, %13, %35 : vector<8x8xi1>, vector<8x8xf32>
    %cst_21 = arith.constant dense<0.000000e+00> : vector<8xf32>
    %37 = vector.multi_reduction <add>, %36, %cst_21 [1] : vector<8x8xf32> to vector<8xf32>
    %38 = vector.shape_cast %37 : vector<8xf32> to vector<8x1xf32>
    %39 = arith.addf %34, %38 : vector<8x1xf32>
    %c0_22 = arith.constant 0 : index
    %c0_23 = arith.constant 0 : index
    %40 = vector.load %arg12[%c0_22, %c0_23] : memref<8x1xf32, #tpu.memory_space<vmem>>, vector<8x1xf32>
    tpu.vector_store %arg12[%c0_22, %c0_23], %39 {strides = array<i32>} : memref<8x1xf32, #tpu.memory_space<vmem>>, vector<8x1xf32>,
    %c0_24 = arith.constant 0 : index
    %c0_25 = arith.constant 0 : index
    %41 = vector.load %arg13[%c0_24, %c0_25] : memref<8x1xf32, #tpu.memory_space<vmem>>, vector<8x1xf32>
    %42 = arith.extui %28 : vector<8x8xi1> to vector<8x8xi32>
    %43 = arith.sitofp %42 : vector<8x8xi32> to vector<8x8xf32>
    %cst_26 = arith.constant dense<0.000000e+00> : vector<8xf32>
    %44 = vector.multi_reduction <add>, %43, %cst_26 [1] : vector<8x8xf32> to vector<8xf32>
    %45 = vector.shape_cast %44 : vector<8xf32> to vector<8x1xf32>
    %46 = arith.addf %41, %45 : vector<8x1xf32>
    %c0_27 = arith.constant 0 : index
    %c0_28 = arith.constant 0 : index
    %47 = vector.load %arg13[%c0_27, %c0_28] : memref<8x1xf32, #tpu.memory_space<vmem>>, vector<8x1xf32>
    tpu.vector_store %arg13[%c0_27, %c0_28], %46 {strides = array<i32>} : memref<8x1xf32, #tpu.memory_space<vmem>>, vector<8x1xf32>,
    %c0_i32_29 = arith.constant 0 : i32
    %48 = arith.cmpi eq, %arg1, %c0_i32_29 : i32
    %49 = arith.extui %48 : i1 to i32
    %c0_i32_30 = arith.constant 0 : i32
    %50 = arith.cmpi ne, %49, %c0_i32_30 : i32
    scf.if %50 {
      %c0_31 = arith.constant 0 : index
      %c0_32 = arith.constant 0 : index
      %51 = vector.load %arg13[%c0_31, %c0_32] : memref<8x1xf32, #tpu.memory_space<vmem>>, vector<8x1xf32>
      %cst_33 = arith.constant 0.000000e+00 : f32
      %52 = vector.broadcast %cst_33 : f32 to vector<8x1xf32>
      %53 = arith.cmpf ogt, %51, %52 : vector<8x1xf32>
      %c0_34 = arith.constant 0 : index
      %c0_35 = arith.constant 0 : index
      %54 = vector.load %arg11[%c0_34, %c0_35] : memref<8x1xf32, #tpu.memory_space<vmem>>, vector<8x1xf32>
      %55 = math.log %54 : vector<8x1xf32>
      %c0_36 = arith.constant 0 : index
      %c0_37 = arith.constant 0 : index
      %56 = vector.load %arg12[%c0_36, %c0_37] : memref<8x1xf32, #tpu.memory_space<vmem>>, vector<8x1xf32>
      %cst_38 = arith.constant 1.000000e+00 : f32
      %57 = vector.broadcast %cst_38 : f32 to vector<8x1xf32>
      %58 = arith.select %53, %56, %57 : vector<8x1xi1>, vector<8x1xf32>
      %cst_39 = arith.constant 1.000000e-30 : f32
      %59 = vector.broadcast %cst_39 : f32 to vector<8x1xf32>
      %60 = arith.maximumf %58, %59 : vector<8x1xf32>
      %61 = math.log %60 : vector<8x1xf32>
      %62 = arith.subf %55, %61 : vector<8x1xf32>
      %cst_40 = arith.constant 0.000000e+00 : f32
      %63 = vector.broadcast %cst_40 : f32 to vector<8x1xf32>
      %64 = arith.select %53, %62, %63 : vector<8x1xi1>, vector<8x1xf32>
      %c0_41 = arith.constant 0 : index
      %c0_42 = arith.constant 0 : index
      %65 = vector.load %arg8[%c0_41, %c0_42] : memref<8x1xf32, #tpu.memory_space<vmem>>, vector<8x1xf32>
      tpu.vector_store %arg8[%c0_41, %c0_42], %64 {strides = array<i32>} : memref<8x1xf32, #tpu.memory_space<vmem>>, vector<8x1xf32>,
      %66 = arith.extui %53 : vector<8x1xi1> to vector<8x1xi32>
      %67 = arith.sitofp %66 : vector<8x1xi32> to vector<8x1xf32>
      %c0_43 = arith.constant 0 : index
      %c0_44 = arith.constant 0 : index
      %68 = vector.load %arg9[%c0_43, %c0_44] : memref<8x1xf32, #tpu.memory_space<vmem>>, vector<8x1xf32>
      tpu.vector_store %arg9[%c0_43, %c0_44], %67 {strides = array<i32>} : memref<8x1xf32, #tpu.memory_space<vmem>>, vector<8x1xf32>,
    } else {
    }
    return
  }
  func.func @transform_0(%arg0: i32, %arg1: i32) -> (i32, i32) {
    %c0_i32 = arith.constant 0 : i32
    %c0_i32_0 = arith.constant 0 : i32
    return %arg0, %c0_i32 : i32, i32
  }
  func.func @transform_1(%arg0: i32, %arg1: i32) -> (i32, i32) {
    %c0_i32 = arith.constant 0 : i32
    %c0_i32_0 = arith.constant 0 : i32
    return %c0_i32, %arg1 : i32, i32
  }
  func.func @transform_2(%arg0: i32, %arg1: i32) -> (i32, i32) {
    %c0_i32 = arith.constant 0 : i32
    %c0_i32_0 = arith.constant 0 : i32
    return %arg0, %c0_i32 : i32, i32
  }
  func.func @transform_3(%arg0: i32, %arg1: i32) -> (i32, i32) {
    %c0_i32 = arith.constant 0 : i32
    %c0_i32_0 = arith.constant 0 : i32
    return %c0_i32, %arg1 : i32, i32
  }
  func.func @transform_4(%arg0: i32, %arg1: i32) -> (i32, i32) {
    %c0_i32 = arith.constant 0 : i32
    %c0_i32_0 = arith.constant 0 : i32
    return %arg0, %c0_i32 : i32, i32
  }
  func.func @transform_5(%arg0: i32, %arg1: i32) -> (i32, i32) {
    %c0_i32 = arith.constant 0 : i32
    %c0_i32_0 = arith.constant 0 : i32
    return %c0_i32, %arg1 : i32, i32
  }
  func.func @transform_6(%arg0: i32, %arg1: i32) -> (i32, i32) {
    %c0_i32 = arith.constant 0 : i32
    %c0_i32_0 = arith.constant 0 : i32
    return %arg0, %c0_i32 : i32, i32
  }
  func.func @transform_7(%arg0: i32, %arg1: i32) -> (i32, i32) {
    %c0_i32 = arith.constant 0 : i32
    %c0_i32_0 = arith.constant 0 : i32
    return %arg0, %c0_i32 : i32, i32
  }
}

module attributes {stable_mosaic.version = 11 : i64} {
  func.func @_ce_kernel(%arg0: memref<8x4xf32, #tpu.memory_space<vmem>>, %arg1: memref<8x1xi32, #tpu.memory_space<vmem>>, %arg2: memref<1xf32, #tpu.memory_space<smem>>) attributes {dimension_semantics = [], scalar_prefetch = 0 : i64, scratch_operands = 0 : i64, tpu.core_type = #tpu.core_type<tc>} {
    %c0 = arith.constant 0 : index
    %c0_0 = arith.constant 0 : index
    %0 = vector.load %arg0[%c0, %c0_0] : memref<8x4xf32, #tpu.memory_space<vmem>>, vector<8x4xf32>
    %c0_1 = arith.constant 0 : index
    %c0_2 = arith.constant 0 : index
    %1 = vector.load %arg1[%c0_1, %c0_2] : memref<8x1xi32, #tpu.memory_space<vmem>>, vector<8x1xi32>
    %cst = arith.constant dense<0xFF800000> : vector<8xf32>
    %2 = vector.multi_reduction <maximumf>, %0, %cst [1] : vector<8x4xf32> to vector<8xf32>
    %3 = vector.shape_cast %2 : vector<8xf32> to vector<8x1xf32>
    %4 = vector.broadcast %3 : vector<8x1xf32> to vector<8x4xf32>
    %5 = arith.subf %0, %4 : vector<8x4xf32>
    %6 = math.exp %5 : vector<8x4xf32>
    %cst_3 = arith.constant dense<0.000000e+00> : vector<8xf32>
    %7 = vector.multi_reduction <add>, %6, %cst_3 [1] : vector<8x4xf32> to vector<8xf32>
    %8 = vector.shape_cast %7 : vector<8xf32> to vector<8x1xf32>
    %9 = math.log %8 : vector<8x1xf32>
    %10 = arith.addf %9, %3 : vector<8x1xf32>
    %11 = tpu.iota {dimensions = array<i32: 1>} : vector<8x4xi32>
    %12 = vector.broadcast %1 : vector<8x1xi32> to vector<8x4xi32>
    %13 = arith.cmpi eq, %11, %12 : vector<8x4xi32>
    %cst_4 = arith.constant 0.000000e+00 : f32
    %14 = vector.broadcast %cst_4 : f32 to vector<8x4xf32>
    %15 = arith.select %13, %0, %14 : vector<8x4xi1>, vector<8x4xf32>
    %cst_5 = arith.constant dense<0.000000e+00> : vector<8xf32>
    %16 = vector.multi_reduction <add>, %15, %cst_5 [1] : vector<8x4xf32> to vector<8xf32>
    %17 = vector.shape_cast %16 : vector<8xf32> to vector<8x1xf32>
    %c-100_i32 = arith.constant -100 : i32
    %18 = vector.broadcast %c-100_i32 : i32 to vector<8x1xi32>
    %19 = arith.cmpi ne, %1, %18 : vector<8x1xi32>
    %20 = arith.extui %19 : vector<8x1xi1> to vector<8x1xi32>
    %21 = arith.sitofp %20 : vector<8x1xi32> to vector<8x1xf32>
    %22 = vector.shape_cast %21 : vector<8x1xf32> to vector<1x8x1xf32>
    %cst_6 = arith.constant dense<0.000000e+00> : vector<1xf32>
    %23 = vector.multi_reduction <add>, %22, %cst_6 [1, 2] : vector<1x8x1xf32> to vector<1xf32>
    %24 = vector.shape_cast %23 : vector<1xf32> to vector<1x1x1xf32>
    %25 = vector.extract %24[0, 0, 0] : f32 from vector<1x1x1xf32>
    %26 = arith.subf %10, %17 : vector<8x1xf32>
    %27 = arith.mulf %26, %21 : vector<8x1xf32>
    %28 = vector.shape_cast %27 : vector<8x1xf32> to vector<1x8x1xf32>
    %cst_7 = arith.constant dense<0.000000e+00> : vector<1xf32>
    %29 = vector.multi_reduction <add>, %28, %cst_7 [1, 2] : vector<1x8x1xf32> to vector<1xf32>
    %30 = vector.shape_cast %29 : vector<1xf32> to vector<1x1x1xf32>
    %31 = vector.extract %30[0, 0, 0] : f32 from vector<1x1x1xf32>
    %cst_8 = arith.constant 0.000000e+00 : f32
    %32 = arith.cmpf ogt, %25, %cst_8 : f32
    %cst_9 = arith.constant 1.000000e+00 : f32
    %33 = arith.maximumf %25, %cst_9 : f32
    %34 = arith.divf %31, %33 : f32
    %cst_10 = arith.constant 0.000000e+00 : f32
    %35 = arith.select %32, %34, %cst_10 : f32
    %c0_11 = arith.constant 0 : index
    %36 = memref.load %arg2[%c0_11] : memref<1xf32, #tpu.memory_space<smem>>
    memref.store %35, %arg2[%c0_11] : memref<1xf32, #tpu.memory_space<smem>>
    return
  }
}

</mosaic_0001>

<llo_original>
// kernel: _lambda_.2
$region0: #{_lambda_.2}
  #allocation0 [shape = 'u32[]', space=smem, size = 0x4, offset = 0x4, fixed_abs, tag = 'smem constant byte address 0x4 - core index']
  #allocation1 [shape = 'u32[144,128]{1,0:T(1,128)}', space=vmem, size = 0x12000, scoped, tag = 'internal scratch']
  %s0 = inlined_call_operand.vmem [shape: f32[8,4], index: 0, kind: input, shape index: {}]
  %s1 = inlined_call_operand.vmem [shape: s32[8,1], index: 1, kind: input, shape index: {}]
  %s2 = inlined_call_operand.hbm [shape: f32[1], index: 2, kind: output, shape index: {}]
  %s3 = sld [smem:[#allocation0]]
  $region18: #{_lambda_.2} parent=0
    _
  %s5 = ssub.s32 1, %s3
  %s6 = scalar_select 0, %s5, %s3
  $region1: #{_lambda_.2} parent=0
    #allocation2 [shape = 'u8[512]{0}', space=smem, size = 0x200, scoped, tag = 'output window, operand 0, single buffered']
    #allocation3 [shape = 's32[1]{0}', space=sflag, size = 0x4, scoped, tag = 'scoped memory for _lambda_.2']
    %7 = vsyncpa [#allocation3], 0
    // Predicated region
    $region2: #{_lambda_.2} parent=1 // pred_check
      _
    $region3: #{_lambda_.2} parent=1 // pred_check_branch
      %9 = sbr.rel (0) target = $region5
    $region4: #{_lambda_.2} parent=1 // pred_region
      _
    $region5: #{_lambda_.2} parent=1 // pred_fallthru
      _
    // Predicated region
    $region6: #{_lambda_.2} parent=1 // pred_check
      _
    $region7: #{_lambda_.2} parent=1 // pred_check_branch
      %11 = sbr.rel (0) target = $region9
    $region8: #{_lambda_.2} parent=1 // pred_region
      _
    $region9: #{_lambda_.2} parent=1 // pred_fallthru
      _
    %v12 = vld [vmem:[%s0] sm:$0xff]
    %v13 = vld [vmem:[%s1] sm:$0xff]
    %vm14 = vcmask 31744
    %v15 = vsel %vm14, %v12, -inf
    %16 = vmax.xlane.f32.xlu0 %v15
    %v17 = vpop.xlane.xlu0 %16
    %v18 = vsub.f32 %v12, %v17
    %v19 = vmul.f32 %v18, 1.442695
    %v20 = vpow.pop %v19
    %v21 = vsel %vm14, %v20, 0.0
    %22 = vadd.xlane.f32.xlu0 %v21
    %v23 = vpop.xlane.xlu0 %22
    %v24 = vlog2.pop %v23
    %v25 = vmul.f32 %v24, 0.6931472
    %v26 = vadd.f32 %v25, %v17
    %v27 = vlaneseq
    %v28 = vand.u32 %v27, 127
    %29 = vset.pattern.permute.xlu0 0
    %30 = vperm.xlu0 %29, %v13
    %v31 = vpop.permute.xlu0 %30
    %vm32 = vcmp.eq.s32.totalorder %v28, %v31
    %v33 = vsel %vm32, %v12, 0.0
    %v34 = vsel %vm14, %v33, 0.0
    %35 = vadd.xlane.f32.xlu0 %v34
    %v36 = vpop.xlane.xlu0 %35
    %vm37 = vcmp.ne.s32.totalorder %v13, 4294967196
    %v38 = vsel %vm37, 1, 0
    %v39 = vcvt.s32.f32 %v38
    %vm40 = vcmask 7168
    %v41 = vsel %vm40, %v39, 0.0
    %42 = vadd.xlane.f32.xlu0 %v41
    %v43 = vpop.xlane.xlu0 %42
    %v44 = vrot.slane %v43, 4
    %v45 = vadd.f32 %v43, %v44
    %v46 = vrot.slane %v45, 2
    %v47 = vadd.f32 %v45, %v46
    %v48 = vrot.slane %v47, 1
    %v49 = vadd.f32 %v47, %v48
    %s50 = vtos %v49
    %v51 = vsub.f32 %v26, %v36
    %v52 = vmul.f32 %v51, %v39
    %v53 = vsel %vm40, %v52, 0.0
    %54 = vadd.xlane.f32.xlu0 %v53
    %v55 = vpop.xlane.xlu0 %54
    %v56 = vrot.slane %v55, 4
    %v57 = vadd.f32 %v55, %v56
    %v58 = vrot.slane %v57, 2
    %v59 = vadd.f32 %v57, %v58
    %v60 = vrot.slane %v59, 1
    %v61 = vadd.f32 %v59, %v60
    %s62 = vtos %v61
    %p63 = scmp.gt.f32.partialorder %s50, 0.0
    %s64 = smax.f32 %s50, 1.0
    %v65 = vstv %s64
    %v66 = vrcp.pop %v65
    %s67 = vtos %v66
    %s68 = smul.f32 %s62, %s67
    %s69 = scalar_select %p63, %s68, 0.0
    %s70 = scalar_lea.smem [#allocation2], 0
    %71 = sst [smem:[%s70]] %s69
    // Predicated region
    $region10: #{_lambda_.2} parent=1 // pred_check
      _
    $region11: #{_lambda_.2} parent=1 // pred_check_branch
      %73 = sbr.rel (0) target = $region13
    $region12: #{_lambda_.2} parent=1 // pred_region
      %s75 = ssub.s32 16, 16
      %76 = vsyncadd [#allocation3], %s75
      %79 = dma.smem_to_hbm [#allocation2], 16, %s2, [#allocation3]
    $region13: #{_lambda_.2} parent=1 // pred_fallthru
      _
    // Predicated region
    $region14: #{_lambda_.2} parent=1 // pred_check
      _
    $region15: #{_lambda_.2} parent=1 // pred_check_branch
      %81 = sbr.rel (0) target = $region17
    $region16: #{_lambda_.2} parent=1 // pred_region
      %82 = dma.done [#allocation3], 16
    $region17: #{_lambda_.2} parent=1 // pred_fallthru
      _
    %83 = sfence
    %84 = vsyncpa [#allocation3], 1

// kernel: _lambda_.3
$region0: #{_lambda_.3}
  #allocation0 [shape = 'u32[]', space=smem, size = 0x4, offset = 0x4, fixed_abs, tag = 'smem constant byte address 0x4 - core index']
  #allocation1 [shape = 'u32[144,128]{1,0:T(1,128)}', space=vmem, size = 0x12000, scoped, tag = 'internal scratch']
  #allocation2 [shape = 'f32[8,32]{1,0:T(8,128)}', space=vmem, size = 0x1000, scoped, tag = 'scratch operand']
  #allocation3 [shape = 'f32[8,1]{1,0:T(8,128)}', space=vmem, size = 0x1000, scoped, tag = 'scratch operand']
  #allocation4 [shape = 'f32[8,1]{1,0:T(8,128)}', space=vmem, size = 0x1000, scoped, tag = 'scratch operand']
  #allocation5 [shape = 'f32[8,1]{1,0:T(8,128)}', space=vmem, size = 0x1000, scoped, tag = 'scratch operand']
  %s0 = inlined_call_operand.vmem [shape: f32[8,32], index: 0, kind: input, shape index: {}]
  %s1 = inlined_call_operand.vmem [shape: f32[32,8], index: 1, kind: input, shape index: {}]
  %s2 = inlined_call_operand.vmem [shape: f32[8,1], index: 2, kind: input, shape index: {}]
  %s3 = inlined_call_operand.vmem [shape: f32[1,8], index: 3, kind: input, shape index: {}]
  %s4 = inlined_call_operand.vmem [shape: s32[8,1], index: 4, kind: input, shape index: {}]
  %s5 = inlined_call_operand.vmem [shape: s32[1,8], index: 5, kind: input, shape index: {}]
  %s6 = inlined_call_operand.vmem [shape: f32[8,1], index: 6, kind: output, shape index: {0}]
  %s7 = inlined_call_operand.vmem [shape: f32[8,1], index: 7, kind: output, shape index: {1}]
  %8 = xla_tuple %s6, %s7
  %s9 = sld [smem:[#allocation0]]
  $region50: #{_lambda_.3} parent=0
    _
  %s11 = ssub.s32 1, %s9
  %s12 = scalar_select 0, %s11, %s9
  // Predicated region
  $region2: #{_lambda_.3} parent=0 // pred_check
    _
  $region3: #{_lambda_.3} parent=0 // pred_check_branch
    %14 = sbr.rel (0) target = $region5
  $region4: #{_lambda_.3} parent=0 // pred_region
    _
  $region5: #{_lambda_.3} parent=0 // pred_fallthru
    _
  // Predicated region
  $region6: #{_lambda_.3} parent=0 // pred_check
    _
  $region7: #{_lambda_.3} parent=0 // pred_check_branch
    %16 = sbr.rel (0) target = $region9
  $region8: #{_lambda_.3} parent=0 // pred_region
    _
  $region9: #{_lambda_.3} parent=0 // pred_fallthru
    _
  // Predicated region
  $region10: #{_lambda_.3} parent=0 // pred_check
    _
  $region11: #{_lambda_.3} parent=0 // pred_check_branch
    %18 = sbr.rel (0) target = $region13
  $region12: #{_lambda_.3} parent=0 // pred_region
    _
  $region13: #{_lambda_.3} parent=0 // pred_fallthru
    _
  // Predicated region
  $region14: #{_lambda_.3} parent=0 // pred_check
    _
  $region15: #{_lambda_.3} parent=0 // pred_check_branch
    %20 = sbr.rel (0) target = $region17
  $region16: #{_lambda_.3} parent=0 // pred_region
    _
  $region17: #{_lambda_.3} parent=0 // pred_fallthru
    _
  // Predicated region
  $region18: #{_lambda_.3} parent=0 // pred_check
    _
  $region19: #{_lambda_.3} parent=0 // pred_check_branch
    %22 = sbr.rel (0) target = $region21
  $region20: #{_lambda_.3} parent=0 // pred_region
    _
  $region21: #{_lambda_.3} parent=0 // pred_fallthru
    _
  // Predicated region
  $region22: #{_lambda_.3} parent=0 // pred_check
    _
  $region23: #{_lambda_.3} parent=0 // pred_check_branch
    %24 = sbr.rel (0) target = $region25
  $region24: #{_lambda_.3} parent=0 // pred_region
    _
  $region25: #{_lambda_.3} parent=0 // pred_fallthru
    _
  %p25 = scmp.eq.s32.totalorder 0, 0
  // Predicated region
  $region26: #{_lambda_.3} parent=0 // pred_check
    %p26 = pneg %p25
  $region27: #{_lambda_.3} parent=0 // pred_check_branch
    %28 = sbr.rel (%p26) target = $region29
  $region28: #{_lambda_.3} parent=0 // pred_region
    %v29 = vld [vmem:[%s0] sm:$0xff]
    %v30 = vld [vmem:[%s2] sm:$0xff]
    %32 = vset.pattern.permute.xlu0 0
    %33 = vperm.xlu0 %32, %v30
    %v34 = vpop.permute.xlu0 %33
    %v36 = vmul.f32 %v29, %v34
    %vm37 = vcmask 261120
    %38 = vst.msk [vmem:[#allocation2] sm:$0xff] %vm37, %v36
    %vm39 = vcmask 7168
    %40 = vst.msk [vmem:[#allocation3] sm:$0xff] %vm39, 0.0
    %41 = vst.msk [vmem:[#allocation4] sm:$0xff] %vm39, 0.0
    %42 = vst.msk [vmem:[#allocation5] sm:$0xff] %vm39, 0.0
  $region29: #{_lambda_.3} parent=0 // pred_fallthru
    _
  %v43 = vld [vmem:[%s1] sm:$0xff]
  %v44 = vld [vmem:[%s1 + $0x8] sm:$0xff]
  %v45 = vld [vmem:[%s1 + $0x10] sm:$0xff]
  %v46 = vld [vmem:[%s1 + $0x18] sm:$0xff]
  %v47 = vld [vmem:[%s3] sm:$0x1]
  %v49 = vlaneseq
  %v50 = vshrl.u32 %v49, 7
  %v51 = vsub.s32 0, %v50
  %v52 = vrot.slane %v47, %v51
  %v54 = vmul.f32 %v43, %v52
  %v55 = vmul.f32 %v44, %v52
  %v56 = vmul.f32 %v45, %v52
  %v57 = vmul.f32 %v46, %v52
  %v58 = vld [vmem:[#allocation2] sm:$0xff]
  %vm59 = vcmask 261120
  %v61 = vsel %vm59, %v58, 0
  %63 = vmatprep.subr.mxu0 0.0
  %64 = vmatpush1.msra.mxu0 %v54
  %65 = vmatprep.subr.mxu0 0.0
  %66 = vmatpush1.msra.mxu0 %v55
  %67 = vmatprep.subr.mxu0 0.0
  %68 = vmatpush1.msra.mxu0 %v56
  %69 = vmatprep.subr.mxu0 0.0
  %70 = vmatpush1.msra.mxu0 %v57
  %71 = vmatprep.subr.mxu0 0.0
  %72 = vmatpush1.msra.mxu0 0.0
  %73 = vmatprep.subr.mxu0 0.0
  %74 = vmatpush1.msra.mxu0 0.0
  %75 = vmatprep.subr.mxu0 0.0
  %76 = vmatpush1.msra.mxu0 0.0
  %77 = vmatprep.subr.mxu0 0.0
  %78 = vmatpush1.msra.mxu0 0.0
  %79 = vmatprep.subr.mxu0 0.0
  %80 = vmatpush1.msra.mxu0 0.0
  %81 = vmatprep.subr.mxu0 0.0
  %82 = vmatpush1.msra.mxu0 0.0
  %83 = vmatprep.subr.mxu0 0.0
  %84 = vmatpush1.msra.mxu0 0.0
  %85 = vmatprep.subr.mxu0 0.0
  %86 = vmatpush1.msra.mxu0 0.0
  %87 = vmatprep.subr.mxu0 0.0
  %88 = vmatpush1.msra.mxu0 0.0
  %89 = vmatprep.subr.mxu0 0.0
  %90 = vmatpush1.msra.mxu0 0.0
  %91 = vmatprep.subr.mxu0 0.0
  %92 = vmatpush1.msra.mxu0 0.0
  %93 = vmatprep.subr.mxu0 0.0
  %94 = vmatpush1.msra.mxu0 0.0
  %95 = vmatprep.subr.mxu0 0.0
  %96 = vmatpush1.msra.mxu0 0.0
  %97 = vmatprep.subr.mxu0 0.0
  %98 = vmatpush1.msra.mxu0 0.0
  %99 = vmatprep.subr.mxu0 0.0
  %100 = vmatpush1.msra.mxu0 0.0
  %101 = vmatprep.subr.mxu0 0.0
  %102 = vmatpush1.msra.mxu0 0.0
  %103 = vmatprep.subr.mxu0 0.0
  %104 = vmatpush1.msra.mxu0 0.0
  %105 = vmatprep.subr.mxu0 0.0
  %106 = vmatpush1.msra.mxu0 0.0
  %107 = vmatprep.subr.mxu0 0.0
  %108 = vmatpush1.msra.mxu0 0.0
  %109 = vmatprep.subr.mxu0 0.0
  %110 = vmatpush1.msra.mxu0 0.0
  %111 = vmatprep.subr.mxu0 0.0
  %112 = vmatpush1.msra.mxu0 0.0
  %113 = vmatprep.subr.mxu0 0.0
  %114 = vmatpush1.msra.mxu0 0.0
  %115 = vmatprep.subr.mxu0 0.0
  %116 = vmatpush1.msra.mxu0 0.0
  %117 = vmatprep.subr.mxu0 0.0
  %118 = vmatpush1.msra.mxu0 0.0
  %119 = vmatprep.subr.mxu0 0.0
  %120 = vmatpush1.msra.mxu0 0.0
  %121 = vmatprep.subr.mxu0 0.0
  %122 = vmatpush1.msra.mxu0 0.0
  %123 = vmatprep.subr.mxu0 0.0
  %124 = vmatpush1.msra.mxu0 0.0
  %125 = vmatprep.subr.mxu0 0.0
  %126 = vmatpush1.msra.mxu0 0.0
  %127 = vmatprep.mubr.f32.mxu0 0.0
  %128 = vmatmul.mubr.f32.gmra.mrb[0].mxu0 %v61
  %v129 = vpop.f32.mrb[0].mxu0
  %v130 = vadd.f32 0.0, %v129
  %v131 = vpop.f32.mrb[0].mxu0
  %132 = vdwg.mxu0
  %v133 = vmul.f32 %v130, 14.285714
  %v134 = vsub.f32 %v133, 14.285714
  %v135 = vmul.f32 %v134, 1.442695
  %v136 = vpow.pop %v135
  %s137 = smul.u32 0, 8
  %v138 = vlaneseq
  %v139 = vshrl.u32 %v138, 7
  %v140 = vstv %s137
  %v141 = vadd.s32 %v140, %v139
  %s142 = smul.u32 0, 8
  %v143 = vlaneseq
  %v144 = vand.u32 %v143, 127
  %v145 = vstv %s142
  %v146 = vadd.s32 %v145, %v144
  %v147 = vld [vmem:[%s4] sm:$0xff]
  %v148 = vld [vmem:[%s5] sm:$0x1]
  %149 = vset.pattern.permute.xlu0 0
  %150 = vperm.xlu0 %149, %v147
  %v151 = vpop.permute.xlu0 %150
  %v152 = vlaneseq
  %v153 = vshrl.u32 %v152, 7
  %v154 = vsub.s32 0, %v153
  %v155 = vrot.slane %v148, %v154
  %vm156 = vcmp.eq.s32.totalorder %v151, %v155
  %vm157 = vcmp.ne.s32.totalorder %v141, %v146
  %vm158 = vmand %vm156, %vm157
  %v159 = vld [vmem:[#allocation3] sm:$0xff]
  %vm160 = vcmask 64512
  %v161 = vsel %vm160, %v136, 0.0
  %162 = vadd.xlane.f32.xlu0 %v161
  %v163 = vpop.xlane.xlu0 %162
  %v164 = vadd.f32 %v159, %v163
  %vm165 = vcmask 7168
  %166 = vst.msk [vmem:[#allocation3] sm:$0xff] %vm165, %v164
  %v167 = vld [vmem:[#allocation4] sm:$0xff]
  %v168 = vsel %vm158, %v136, 0.0
  %v169 = vsel %vm160, %v168, 0.0
  %170 = vadd.xlane.f32.xlu0 %v169
  %v171 = vpop.xlane.xlu0 %170
  %v172 = vadd.f32 %v167, %v171
  %173 = vst.msk [vmem:[#allocation4] sm:$0xff] %vm165, %v172
  %v174 = vld [vmem:[#allocation5] sm:$0xff]
  %v175 = vsel %vm158, 1, 0
  %v176 = vcvt.s32.f32 %v175
  %v177 = vsel %vm160, %v176, 0.0
  %178 = vadd.xlane.f32.xlu0 %v177
  %v179 = vpop.xlane.xlu0 %178
  %v180 = vadd.f32 %v174, %v179
  %181 = vst.msk [vmem:[#allocation5] sm:$0xff] %vm165, %v180
  // Predicated region
  $region30: #{_lambda_.3} parent=0 // pred_check
    %p182 = pneg %p25
  $region31: #{_lambda_.3} parent=0 // pred_check_branch
    %184 = sbr.rel (%p182) target = $region33
  $region32: #{_lambda_.3} parent=0 // pred_region
    %v185 = vld [vmem:[#allocation5] sm:$0xff]
    %vm186 = vcmp.gt.f32.partialorder %v185, 0.0
    %v187 = vld [vmem:[#allocation3] sm:$0xff]
    %v188 = vlog2.pop %v187
    %v189 = vmul.f32 %v188, 0.6931472
    %v190 = vld [vmem:[#allocation4] sm:$0xff]
    %v191 = vsel %vm186, %v190, 1.0
    %v192 = vmax.f32 %v191, 1e-30
    %v193 = vlog2.pop %v192
    %v194 = vmul.f32 %v193, 0.6931472
    %v195 = vsub.f32 %v189, %v194
    %v196 = vsel %vm186, %v195, 0.0
    %197 = vst.msk [vmem:[%s6] sm:$0xff] %vm165, %v196
    %v198 = vsel %vm186, 1, 0
    %v199 = vcvt.s32.f32 %v198
    %200 = vst.msk [vmem:[%s7] sm:$0xff] %vm165, %v199
  $region33: #{_lambda_.3} parent=0 // pred_fallthru
    _
  // Predicated region
  $region34: #{_lambda_.3} parent=0 // pred_check
    _
  $region35: #{_lambda_.3} parent=0 // pred_check_branch
    %202 = sbr.rel (0) target = $region37
  $region36: #{_lambda_.3} parent=0 // pred_region
    _
  $region37: #{_lambda_.3} parent=0 // pred_fallthru
    _
  // Predicated region
  $region38: #{_lambda_.3} parent=0 // pred_check
    _
  $region39: #{_lambda_.3} parent=0 // pred_check_branch
    %204 = sbr.rel (0) target = $region41
  $region40: #{_lambda_.3} parent=0 // pred_region
    _
  $region41: #{_lambda_.3} parent=0 // pred_fallthru
    _
  // Predicated region
  $region42: #{_lambda_.3} parent=0 // pred_check
    _
  $region43: #{_lambda_.3} parent=0 // pred_check_branch
    %206 = sbr.rel (0) target = $region45
  $region44: #{_lambda_.3} parent=0 // pred_region
    _
  $region45: #{_lambda_.3} parent=0 // pred_fallthru
    _
  // Predicated region
  $region46: #{_lambda_.3} parent=0 // pred_check
    _
  $region47: #{_lambda_.3} parent=0 // pred_check_branch
    %208 = sbr.rel (0) target = $region49
  $region48: #{_lambda_.3} parent=0 // pred_region
    _
  $region49: #{_lambda_.3} parent=0 // pred_fallthru
    _

</llo_original>
